<compile_context>
chip_gen: v6e
topology: v6e:2x2x1
jax: 0.10.0
libtpu: 0.0.40
codegen_flags: <defaults>
</compile_context>

<pallas_src>
import jax
import jax.numpy as jnp
from jax.experimental import pallas as pl
from jax.experimental.pallas import tpu as pltpu


# ----------------------------- Pallas kernel -----------------------------
def _moe_expert_kernel(eid_ref, act_ref, pinf_ref,            # scalar prefetch (SMEM)
                       x_ref, w1_ref, v1_ref, w2_ref, rw_ref,  # inputs (VMEM)
                       o_ref,                                  # output (VMEM)
                       acc_ref):                               # scratch (VMEM f32)
    """Grid = (seq tiles, expert slots, ffn tiles)."""
    e = pl.program_id(1)
    f = pl.program_id(2)

    @pl.when((e == 0) & (f == 0))
    def _init():
        acc_ref[...] = jnp.zeros_like(acc_ref)

    # Dead slots (experts no token routed to) alias the previous slot's weight
    # blocks (so no new DMA is issued by the pipeline) and skip all compute.
    @pl.when(act_ref[e] == 1)
    def _compute():
        x = x_ref[...]                                          # (TS, D)  bf16
        h = jnp.dot(x, w1_ref[...],
                    preferred_element_type=jnp.float32)         # (TS, TF) f32
        v = jnp.dot(x, v1_ref[...],
                    preferred_element_type=jnp.float32)         # (TS, TF) f32
        inter = (h * jax.nn.sigmoid(h)) * v                     # silu(h)*v, f32
        part = jnp.dot(inter.astype(w2_ref.dtype), w2_ref[...],
                       preferred_element_type=jnp.float32)      # (TS, D)  f32
        acc_ref[...] += part * rw_ref[...]                      # (TS, 1) scale

    @pl.when((e == pl.num_programs(1) - 1) & (f == pl.num_programs(2) - 1))
    def _finalize():
        o_ref[...] = acc_ref[...].astype(o_ref.dtype)


def _moe_pallas(x, w1_t, v1_t, w2, routing_w, eid, act, pinf, *,
                block_s, block_f):
    S, D = x.shape
    E, _, F = w1_t.shape
    n_s = S // block_s
    n_f = F // block_f

    def x_map(s, e, f, eid_ref, act_ref, pinf_ref):
        return (s, 0)

    def w1_map(s, e, f, eid_ref, act_ref, pinf_ref):
        return (eid_ref[e], 0, pinf_ref[e, f])

    def w2_map(s, e, f, eid_ref, act_ref, pinf_ref):
        return (eid_ref[e], pinf_ref[e, f], 0)

    def rw_map(s, e, f, eid_ref, act_ref, pinf_ref):
        return (eid_ref[e], s, 0)

    def out_map(s, e, f, eid_ref, act_ref, pinf_ref):
        return (s, 0)

    return pl.pallas_call(
        _moe_expert_kernel,
        out_shape=jax.ShapeDtypeStruct((S, D), x.dtype),
        grid_spec=pltpu.PrefetchScalarGridSpec(
            num_scalar_prefetch=3,
            grid=(n_s, E, n_f),
            in_specs=[
                pl.BlockSpec((block_s, D), x_map),                        # x
                pl.BlockSpec((pl.Squeezed(), D, block_f), w1_map),        # w1_t
                pl.BlockSpec((pl.Squeezed(), D, block_f), w1_map),        # v1_t
                pl.BlockSpec((pl.Squeezed(), block_f, D), w2_map),        # w2
                pl.BlockSpec((pl.Squeezed(), block_s, 1), rw_map),        # routing
            ],
            out_specs=pl.BlockSpec((block_s, D), out_map),
            scratch_shapes=[pltpu.VMEM((block_s, D), jnp.float32)],
        ),
        compiler_params=pltpu.CompilerParams(
            dimension_semantics=("parallel", "arbitrary", "arbitrary"),
            vmem_limit_bytes=48 * 1024 * 1024,   # safe on v5e/v6e/v7x
        ),
    )(eid, act, pinf, x, w1_t, v1_t, w2, routing_w)


def _active_expert_tables(weights, n_f):
    """Scalar-prefetch tables so unrouted experts are skipped.

    weights: (S, E) routing weights (exact zeros for unrouted experts).
    Returns int32 arrays:
      eid  (E,)     slot -> expert id; active experts occupy the leading
                    slots, dead slots alias the last active expert.
      act  (E,)     1 for live slots, 0 for dead slots (compute gate).
      pinf (E, n_f) per-slot ffn-tile index; dead slots pin to the last tile
                    so block indices never change (no new DMA).
    """
    E = weights.shape[1]
    active = jnp.any(weights > 0, axis=0)                              # (E,)
    order = jnp.argsort((~active).astype(jnp.int32)).astype(jnp.int32)  # active first
    n_active = jnp.sum(active.astype(jnp.int32))
    last_active = order[jnp.maximum(n_active - 1, 0)]
    slot = jnp.arange(E, dtype=jnp.int32)
    live = slot < n_active
    eid = jnp.where(live, order, last_active).astype(jnp.int32)
    act = live.astype(jnp.int32)
    f_idx = jnp.arange(n_f, dtype=jnp.int32)
    pinf = jnp.where(live[:, None], f_idx[None, :], n_f - 1).astype(jnp.int32)
    return eid, act, pinf


# ----------------------------- Module wrapper -----------------------------
class BlockSparseMoE:
    """JAX/Pallas port of dbrx BlockSparseMoE.forward (single shard)."""

    def __init__(self, *, d_model, ffn_hidden_size, num_experts, top_k,
                 moe_normalize_expert_weights, key,
                 block_s=None, block_f=None, dtype=jnp.bfloat16):
        self.hidden_dim = d_model
        self.ffn_dim = ffn_hidden_size
        self.num_experts = num_experts
        self.top_k = top_k
        self.moe_normalize_expert_weights = moe_normalize_expert_weights
        self.block_s = block_s
        self.block_f = block_f
        self.dtype = dtype

        E, F, D = num_experts, ffn_hidden_size, d_model
        kg, k1, k2, k3 = jax.random.split(key, 4)
        scale = 0.02
        # gate.weight: (num_experts, d_model)   (FastLinear, no bias)
        self.gate_w = (scale * jax.random.normal(kg, (E, D), jnp.float32)
                       ).astype(dtype)
        # w1 / v1 / w2 arrive as (E*F, D) (see _load_experts).  Reshape /
        # transpose ONCE here and store in bf16 so the MXU consumes them
        # directly and no per-call HBM copy is made.
        w1 = scale * jax.random.normal(k1, (E * F, D), jnp.float32)
        v1 = scale * jax.random.normal(k2, (E * F, D), jnp.float32)
        w2 = scale * jax.random.normal(k3, (E * F, D), jnp.float32)
        self.w1_t = w1.reshape(E, F, D).transpose(0, 2, 1).astype(dtype)  # (E,D,F)
        self.v1_t = v1.reshape(E, F, D).transpose(0, 2, 1).astype(dtype)  # (E,D,F)
        self.w2_r = w2.reshape(E, F, D).astype(dtype)                     # (E,F,D)

    def _routing_weights(self, x):
        xd = x.astype(self.dtype)
        logits = jnp.dot(xd, self.gate_w.T,
                         preferred_element_type=jnp.float32)   # (S, E)
        probs = jax.nn.softmax(logits, axis=-1)                # f32 softmax
        S = x.shape[0]
        if self.top_k < self.num_experts:
            _, top_idx = jax.lax.top_k(probs, self.top_k)
            mask = jnp.zeros_like(probs)
            mask = mask.at[jnp.arange(S)[:, None], top_idx].set(1.0)
            probs = probs * mask
        if self.moe_normalize_expert_weights:
            p = float(self.moe_normalize_expert_weights)
            norm = jnp.sum(jnp.abs(probs) ** p, axis=-1, keepdims=True) ** (1.0 / p)
            probs = probs / norm
        # torch casts routing weights to the activation dtype before applying.
        return probs.astype(self.dtype).astype(jnp.float32)    # (S, E) f32

    def __call__(self, x):
        S, D = x.shape
        F = self.ffn_dim
        block_s = self.block_s or min(S, 256)
        block_f = self.block_f or min(F, 512)
        assert S % block_s == 0 and F % block_f == 0
        weights = self._routing_weights(x)                     # (S, E) f32
        routing_w = jnp.transpose(weights)[:, :, None]         # (E, S, 1) f32
        eid, act, pinf = _active_expert_tables(weights, F // block_f)
        return _moe_pallas(x.astype(self.dtype), self.w1_t, self.v1_t,
                           self.w2_r, routing_w, eid, act, pinf,
                           block_s=block_s, block_f=block_f)

    # pure-JAX reference mirroring torch dense_forward (same dtype recipe)
    def reference(self, x):
        xd = x.astype(self.dtype)
        weights = self._routing_weights(x)                      # (S, E) f32
        h = jnp.einsum('sd,edf->esf', xd, self.w1_t,
                       preferred_element_type=jnp.float32)
        v = jnp.einsum('sd,edf->esf', xd, self.v1_t,
                       preferred_element_type=jnp.float32)
        inter = ((h * jax.nn.sigmoid(h)) * v).astype(self.dtype)
        out = jnp.einsum('esf,efd->esd', inter, self.w2_r,
                         preferred_element_type=jnp.float32)
        out = out * jnp.transpose(weights)[:, :, None]
        return out.sum(0).astype(self.dtype)


# --------------------------------- main ---------------------------------
if __name__ == "__main__":
    key = jax.random.PRNGKey(0)
    k_param, k_x = jax.random.split(key)

    SEQ = 8
    D_MODEL = 128
    FFN = 256
    NUM_EXPERTS = 8
    TOP_K = 2

    moe = BlockSparseMoE(
        d_model=D_MODEL,
        ffn_hidden_size=FFN,
        num_experts=NUM_EXPERTS,
        top_k=TOP_K,
        moe_normalize_expert_weights=1,
        key=k_param,
        block_s=8,
        block_f=128,      # F=256 -> 2 ffn tiles, exercises the reduction axis
    )

    x = jax.random.normal(k_x, (SEQ, D_MODEL), jnp.float32).astype(jnp.bfloat16)

    out = jax.block_until_ready(moe(x))
    ref = jax.block_until_ready(moe.reference(x))

    assert out.shape == (SEQ, D_MODEL)
    out_f = out.astype(jnp.float32)
    ref_f = ref.astype(jnp.float32)
    max_err = jnp.max(jnp.abs(out_f - ref_f))
    assert jnp.allclose(out_f, ref_f, atol=2e-3, rtol=2e-2), (
        f"max abs err {max_err}")
    print("KERNEL_OK")
</pallas_src>

<mosaic_0001>
module attributes {stable_mosaic.version = 11 : i64} {
  func.func @_moe_expert_kernel(%arg0: i32, %arg1: i32, %arg2: i32, %arg3: memref<8xi32, #tpu.memory_space<smem>>, %arg4: memref<8xi32, #tpu.memory_space<smem>>, %arg5: memref<8x2xi32, #tpu.memory_space<smem>>, %arg6: memref<8x128xbf16, #tpu.memory_space<vmem>>, %arg7: memref<1x128x128xbf16, #tpu.memory_space<vmem>>, %arg8: memref<1x128x128xbf16, #tpu.memory_space<vmem>>, %arg9: memref<1x128x128xbf16, #tpu.memory_space<vmem>>, %arg10: memref<1x8x1xf32, #tpu.memory_space<vmem>>, %arg11: memref<8x128xbf16, #tpu.memory_space<vmem>>, %arg12: memref<8x128xf32, #tpu.memory_space<vmem>>) attributes {dimension_semantics = [#tpu.dimension_semantics<parallel>, #tpu.dimension_semantics<arbitrary>, #tpu.dimension_semantics<arbitrary>], iteration_bounds = array<i64: 1, 8, 2>, scalar_prefetch = 3 : i64, scratch_operands = 1 : i64, tpu.core_type = #tpu.core_type<tc>, window_params = [{transform_indices = @transform_0, window_bounds = array<i64: 8, 128>}, {transform_indices = @transform_1, window_bounds = array<i64: 1, 128, 128>}, {transform_indices = @transform_2, window_bounds = array<i64: 1, 128, 128>}, {transform_indices = @transform_3, window_bounds = array<i64: 1, 128, 128>}, {transform_indices = @transform_4, window_bounds = array<i64: 1, 8, 1>}, {transform_indices = @transform_5, window_bounds = array<i64: 8, 128>}]} {
    %c0_i32 = arith.constant 0 : i32
    %0 = arith.cmpi eq, %arg1, %c0_i32 : i32
    %c0_i32_0 = arith.constant 0 : i32
    %1 = arith.cmpi eq, %arg2, %c0_i32_0 : i32
    %2 = arith.andi %0, %1 : i1
    %3 = arith.extui %2 : i1 to i32
    %c0_i32_1 = arith.constant 0 : i32
    %4 = arith.cmpi ne, %3, %c0_i32_1 : i32
    scf.if %4 {
      %cst = arith.constant 0.000000e+00 : f32
      %15 = vector.broadcast %cst : f32 to vector<8x128xf32>
      %c0 = arith.constant 0 : index
      %c0_5 = arith.constant 0 : index
      %16 = vector.load %arg12[%c0, %c0_5] : memref<8x128xf32, #tpu.memory_space<vmem>>, vector<8x128xf32>
      tpu.vector_store %arg12[%c0, %c0_5], %15 {strides = array<i32>} : memref<8x128xf32, #tpu.memory_space<vmem>>, vector<8x128xf32>,
    } else {
    }
    %5 = arith.index_cast %arg1 : i32 to index
    %6 = memref.load %arg4[%5] : memref<8xi32, #tpu.memory_space<smem>>
    %c1_i32 = arith.constant 1 : i32
    %7 = arith.cmpi eq, %6, %c1_i32 : i32
    %8 = arith.extui %7 : i1 to i32
    %c0_i32_2 = arith.constant 0 : i32
    %9 = arith.cmpi ne, %8, %c0_i32_2 : i32
    scf.if %9 {
      %c0 = arith.constant 0 : index
      %c0_5 = arith.constant 0 : index
      %15 = vector.load %arg6[%c0, %c0_5] : memref<8x128xbf16, #tpu.memory_space<vmem>>, vector<8x128xbf16>
      %c0_6 = arith.constant 0 : index
      %c0_7 = arith.constant 0 : index
      %c0_8 = arith.constant 0 : index
      %16 = vector.load %arg7[%c0_6, %c0_7, %c0_8] : memref<1x128x128xbf16, #tpu.memory_space<vmem>>, vector<1x128x128xbf16>
      %17 = vector.shape_cast %16 : vector<1x128x128xbf16> to vector<128x128xbf16>
      %cst = arith.constant dense<0.000000e+00> : vector<8x128xf32>
      %18 = tpu.matmul %15, %17, %cst {dimension_numbers = #tpu.dot_dimension_numbers<[1], [0], [0], [1], [0, 0, 1, 1], [], []>} : vector<8x128xbf16>, vector<128x128xbf16>, vector<8x128xf32> -> vector<8x128xf32>
      %c0_9 = arith.constant 0 : index
      %c0_10 = arith.constant 0 : index
      %c0_11 = arith.constant 0 : index
      %19 = vector.load %arg8[%c0_9, %c0_10, %c0_11] : memref<1x128x128xbf16, #tpu.memory_space<vmem>>, vector<1x128x128xbf16>
      %20 = vector.shape_cast %19 : vector<1x128x128xbf16> to vector<128x128xbf16>
      %cst_12 = arith.constant dense<0.000000e+00> : vector<8x128xf32>
      %21 = tpu.matmul %15, %20, %cst_12 {dimension_numbers = #tpu.dot_dimension_numbers<[1], [0], [0], [1], [0, 0, 1, 1], [], []>} : vector<8x128xbf16>, vector<128x128xbf16>, vector<8x128xf32> -> vector<8x128xf32>
      %22 = arith.negf %18 : vector<8x128xf32>
      %23 = math.exp %22 : vector<8x128xf32>
      %cst_13 = arith.constant 1.000000e+00 : f32
      %24 = vector.broadcast %cst_13 : f32 to vector<8x128xf32>
      %25 = arith.addf %24, %23 : vector<8x128xf32>
      %26 = arith.divf %24, %25 : vector<8x128xf32>
      %27 = arith.mulf %18, %26 : vector<8x128xf32>
      %28 = arith.mulf %27, %21 : vector<8x128xf32>
      %29 = arith.truncf %28 : vector<8x128xf32> to vector<8x128xbf16>
      %c0_14 = arith.constant 0 : index
      %c0_15 = arith.constant 0 : index
      %c0_16 = arith.constant 0 : index
      %30 = vector.load %arg9[%c0_14, %c0_15, %c0_16] : memref<1x128x128xbf16, #tpu.memory_space<vmem>>, vector<1x128x128xbf16>
      %31 = vector.shape_cast %30 : vector<1x128x128xbf16> to vector<128x128xbf16>
      %cst_17 = arith.constant dense<0.000000e+00> : vector<8x128xf32>
      %32 = tpu.matmul %29, %31, %cst_17 {dimension_numbers = #tpu.dot_dimension_numbers<[1], [0], [0], [1], [0, 0, 1, 1], [], []>} : vector<8x128xbf16>, vector<128x128xbf16>, vector<8x128xf32> -> vector<8x128xf32>
      %c0_18 = arith.constant 0 : index
      %c0_19 = arith.constant 0 : index
      %33 = vector.load %arg12[%c0_18, %c0_19] : memref<8x128xf32, #tpu.memory_space<vmem>>, vector<8x128xf32>
      %c0_20 = arith.constant 0 : index
      %c0_21 = arith.constant 0 : index
      %c0_22 = arith.constant 0 : index
      %34 = vector.load %arg10[%c0_20, %c0_21, %c0_22] : memref<1x8x1xf32, #tpu.memory_space<vmem>>, vector<1x8x1xf32>
      %35 = vector.shape_cast %34 : vector<1x8x1xf32> to vector<8x1xf32>
      %36 = vector.broadcast %35 : vector<8x1xf32> to vector<8x128xf32>
      %37 = arith.mulf %32, %36 : vector<8x128xf32>
      %38 = arith.addf %33, %37 : vector<8x128xf32>
      %c0_23 = arith.constant 0 : index
      %c0_24 = arith.constant 0 : index
      %39 = vector.load %arg12[%c0_23, %c0_24] : memref<8x128xf32, #tpu.memory_space<vmem>>, vector<8x128xf32>
      tpu.vector_store %arg12[%c0_23, %c0_24], %38 {strides = array<i32>} : memref<8x128xf32, #tpu.memory_space<vmem>>, vector<8x128xf32>,
    } else {
    }
    %c7_i32 = arith.constant 7 : i32
    %10 = arith.cmpi eq, %arg1, %c7_i32 : i32
    %c1_i32_3 = arith.constant 1 : i32
    %11 = arith.cmpi eq, %arg2, %c1_i32_3 : i32
    %12 = arith.andi %10, %11 : i1
    %13 = arith.extui %12 : i1 to i32
    %c0_i32_4 = arith.constant 0 : i32
    %14 = arith.cmpi ne, %13, %c0_i32_4 : i32
    scf.if %14 {
      %c0 = arith.constant 0 : index
      %c0_5 = arith.constant 0 : index
      %15 = vector.load %arg12[%c0, %c0_5] : memref<8x128xf32, #tpu.memory_space<vmem>>, vector<8x128xf32>
      %16 = arith.truncf %15 : vector<8x128xf32> to vector<8x128xbf16>
      %c0_6 = arith.constant 0 : index
      %c0_7 = arith.constant 0 : index
      %17 = vector.load %arg11[%c0_6, %c0_7] : memref<8x128xbf16, #tpu.memory_space<vmem>>, vector<8x128xbf16>
      tpu.vector_store %arg11[%c0_6, %c0_7], %16 {strides = array<i32>} : memref<8x128xbf16, #tpu.memory_space<vmem>>, vector<8x128xbf16>,
    } else {
    }
    return
  }
  func.func @transform_0(%arg0: i32, %arg1: i32, %arg2: i32, %arg3: memref<8xi32, #tpu.memory_space<smem>>, %arg4: memref<8xi32, #tpu.memory_space<smem>>, %arg5: memref<8x2xi32, #tpu.memory_space<smem>>) -> (i32, i32) {
    %c0_i32 = arith.constant 0 : i32
    %c0_i32_0 = arith.constant 0 : i32
    return %arg0, %c0_i32 : i32, i32
  }
  func.func @transform_1(%arg0: i32, %arg1: i32, %arg2: i32, %arg3: memref<8xi32, #tpu.memory_space<smem>>, %arg4: memref<8xi32, #tpu.memory_space<smem>>, %arg5: memref<8x2xi32, #tpu.memory_space<smem>>) -> (i32, i32, i32) {
    %0 = arith.index_cast %arg1 : i32 to index
    %1 = memref.load %arg3[%0] : memref<8xi32, #tpu.memory_space<smem>>
    %2 = arith.index_cast %arg1 : i32 to index
    %3 = arith.index_cast %arg2 : i32 to index
    %4 = memref.load %arg5[%2, %3] : memref<8x2xi32, #tpu.memory_space<smem>>
    %c0_i32 = arith.constant 0 : i32
    %c0_i32_0 = arith.constant 0 : i32
    return %1, %c0_i32, %4 : i32, i32, i32
  }
  func.func @transform_2(%arg0: i32, %arg1: i32, %arg2: i32, %arg3: memref<8xi32, #tpu.memory_space<smem>>, %arg4: memref<8xi32, #tpu.memory_space<smem>>, %arg5: memref<8x2xi32, #tpu.memory_space<smem>>) -> (i32, i32, i32) {
    %0 = arith.index_cast %arg1 : i32 to index
    %1 = memref.load %arg3[%0] : memref<8xi32, #tpu.memory_space<smem>>
    %2 = arith.index_cast %arg1 : i32 to index
    %3 = arith.index_cast %arg2 : i32 to index
    %4 = memref.load %arg5[%2, %3] : memref<8x2xi32, #tpu.memory_space<smem>>
    %c0_i32 = arith.constant 0 : i32
    %c0_i32_0 = arith.constant 0 : i32
    return %1, %c0_i32, %4 : i32, i32, i32
  }
  func.func @transform_3(%arg0: i32, %arg1: i32, %arg2: i32, %arg3: memref<8xi32, #tpu.memory_space<smem>>, %arg4: memref<8xi32, #tpu.memory_space<smem>>, %arg5: memref<8x2xi32, #tpu.memory_space<smem>>) -> (i32, i32, i32) {
    %0 = arith.index_cast %arg1 : i32 to index
    %1 = memref.load %arg3[%0] : memref<8xi32, #tpu.memory_space<smem>>
    %2 = arith.index_cast %arg1 : i32 to index
    %3 = arith.index_cast %arg2 : i32 to index
    %4 = memref.load %arg5[%2, %3] : memref<8x2xi32, #tpu.memory_space<smem>>
    %c0_i32 = arith.constant 0 : i32
    %c0_i32_0 = arith.constant 0 : i32
    return %1, %4, %c0_i32 : i32, i32, i32
  }
  func.func @transform_4(%arg0: i32, %arg1: i32, %arg2: i32, %arg3: memref<8xi32, #tpu.memory_space<smem>>, %arg4: memref<8xi32, #tpu.memory_space<smem>>, %arg5: memref<8x2xi32, #tpu.memory_space<smem>>) -> (i32, i32, i32) {
    %0 = arith.index_cast %arg1 : i32 to index
    %1 = memref.load %arg3[%0] : memref<8xi32, #tpu.memory_space<smem>>
    %c0_i32 = arith.constant 0 : i32
    %c0_i32_0 = arith.constant 0 : i32
    return %1, %arg0, %c0_i32 : i32, i32, i32
  }
  func.func @transform_5(%arg0: i32, %arg1: i32, %arg2: i32, %arg3: memref<8xi32, #tpu.memory_space<smem>>, %arg4: memref<8xi32, #tpu.memory_space<smem>>, %arg5: memref<8x2xi32, #tpu.memory_space<smem>>) -> (i32, i32) {
    %c0_i32 = arith.constant 0 : i32
    %c0_i32_0 = arith.constant 0 : i32
    return %arg0, %c0_i32 : i32, i32
  }
}

</mosaic_0001>

<llo_original>
// kernel: tpu_custom_call.1
$region0: #{tpu_custom_call.1}
  #allocation0 [shape = 'u32[]', space=smem, size = 0x4, offset = 0x4, fixed_abs, tag = 'smem constant byte address 0x4 - core index']
  #allocation1 [shape = 'u32[144,128]{1,0:T(1,128)}', space=vmem, size = 0x12000, scoped, tag = 'internal scratch']
  #allocation2 [shape = 'f32[8,128]{1,0:T(8,128)}', space=vmem, size = 0x1000, scoped, tag = 'scratch operand']
  #allocation3 [shape = 's32[1]{0}', space=sflag, size = 0x4, scoped, tag = 'scoped memory for tpu_custom_call.1']
  #allocation4 [shape = 'u8[512]{0}', space=smem, size = 0x200, scoped, tag = 'prefetched SMEM operand 0']
  #allocation5 [shape = 'u8[512]{0}', space=smem, size = 0x200, scoped, tag = 'prefetched SMEM operand 1']
  #allocation6 [shape = 'u8[4096]{0}', space=smem, size = 0x1000, scoped, tag = 'prefetched SMEM operand 2']
  %s0 = inlined_call_operand.vmem [shape: s32[8], index: 0, kind: input, shape index: {}]
  %s1 = inlined_call_operand.vmem [shape: s32[8], index: 1, kind: input, shape index: {}]
  %s2 = inlined_call_operand.vmem [shape: s32[8,2], index: 2, kind: input, shape index: {}]
  %s3 = inlined_call_operand.vmem [shape: bf16[8,128], index: 3, kind: input, shape index: {}]
  %s4 = inlined_call_operand.hbm [shape: bf16[8,128,256], index: 4, kind: input, shape index: {}]
  %s5 = inlined_call_operand.hbm [shape: bf16[8,128,256], index: 5, kind: input, shape index: {}]
  %s6 = inlined_call_operand.hbm [shape: bf16[8,256,128], index: 6, kind: input, shape index: {}]
  %s7 = inlined_call_operand.vmem [shape: f32[8,8,1], index: 7, kind: input, shape index: {}]
  %s8 = inlined_call_operand.hbm [shape: bf16[8,128], index: 8, kind: output, shape index: {}]
  %s9 = sld [smem:[#allocation0]]
  $region77: #{tpu_custom_call.1} parent=0
    _
  %s11 = ssub.s32 1, %s9
  %s12 = scalar_select 0, %s11, %s9
  %s13 = sshll.u32 %s0, 4
  %s14 = int_to_ptr.vmem [resolvable:$true] %s13
  %16 = dma.vmem_to_smem %s14, 16, [#allocation4], [#allocation3]
  %s17 = sshll.u32 %s1, 4
  %s18 = int_to_ptr.vmem [resolvable:$true] %s17
  %20 = dma.vmem_to_smem %s18, 16, [#allocation5], [#allocation3]
  %s21 = sshll.u32 %s2, 4
  %s22 = int_to_ptr.vmem [resolvable:$true] %s21
  %24 = dma.vmem_to_smem %s22, 128, [#allocation6], [#allocation3]
  %25 = dma.done [#allocation3], 160
  %26 = sfence
  $region1: #{tpu_custom_call.1} parent=0
    #allocation7 [shape = 'u8[65536]{0}', space=vmem, size = 0x10000, scoped, tag = 'input window, operand 4']
    #allocation8 [shape = 's32[2]{0}', space=sflag, size = 0x8, scoped, tag = 'scoped memory for tpu_custom_call.1']
    #allocation9 [shape = 's32[2]{0}', space=sflag, size = 0x8, scoped, tag = 'scoped memory for tpu_custom_call.1']
    #allocation10 [shape = 'u8[65536]{0}', space=vmem, size = 0x10000, scoped, tag = 'input window, operand 5']
    #allocation11 [shape = 's32[2]{0}', space=sflag, size = 0x8, scoped, tag = 'scoped memory for tpu_custom_call.1']
    #allocation12 [shape = 'u8[65536]{0}', space=vmem, size = 0x10000, scoped, tag = 'input window, operand 6']
    #allocation13 [shape = 'u8[2048]{0}', space=vmem, size = 0x800, scoped, tag = 'output window, operand 0, single buffered']
    %27 = vsyncpa [#allocation8], 0
    %s28 = scalar_lea.sflag [#allocation8], 1
    %29 = vsyncpa %s28, 0
    %30 = vsyncpa [#allocation11], 0
    %s31 = scalar_lea.sflag [#allocation11], 1
    %32 = vsyncpa %s31, 0
    %33 = vsyncpa [#allocation9], 0
    loop: start=0, step=1, limit=18
    $region2: #{tpu_custom_call.1} parent=1 // loop_pre_header
      _
    $region3: #{tpu_custom_call.1} parent=1 // loop_header
      %s35 = sphi 0, %s39
      %p36 = scmp.ge.s32.totalorder %s35, 18
      %s42 = sphi 0, %s61
      %s43 = sphi 0, %s57
      %s44 = sphi 0, %s53
      %s45 = sphi 0, %s42
      %s46 = sphi 0, %s43
      %s47 = sphi 0, %s44
      %s48 = sphi 0, %s45
      %s49 = sphi 0, %s46
      %s50 = sphi 0, %s47
      %s64 = sphi 0, %s66
      %s67 = sphi 0, %s64
      %s68 = sphi 0, %s67
      %s84 = sphi 0, %s68
      %s110 = sphi 0, %s112
      %s113 = sphi 0, %s110
      %s114 = sphi 0, %s113
      %s130 = sphi 0, %s114
      %s156 = sphi 0, %s158
      %s159 = sphi 0, %s156
      %s160 = sphi 0, %s159
      %s176 = sphi 0, %s160
      %s202 = sphi 0, %s204
      %s205 = sphi 0, %s202
      %s206 = sphi 0, %s205
      %s222 = sphi 0, %s206
      %s232 = sphi 0, %s234
      %s235 = sphi 0, %s232
      %s236 = sphi 0, %s235
      %s252 = sphi 0, %s236
      %s258 = sphi 0, %s260
      %s261 = sphi 0, %s258
      %s262 = sphi 0, %s261
      %s278 = sphi 0, %s262
    $region4: #{tpu_custom_call.1} parent=1 // loop_header_branch
      %38 = sbr.rel (%p36) target = $region8
    $region5: #{tpu_custom_call.1} parent=1 // loop_body
      %s40 = ssub.s32 %s35, 1
      %s41 = ssub.s32 %s35, 2
      %s51 = sadd.s32 1, %s44
      %p52 = scmp.ge.s32.totalorder %s51, 2
      %s53 = scalar_select %p52, 0, %s51
      %s54 = sadd.s32 1, %s43
      %s55 = scalar_select %p52, %s54, %s43
      %p56 = scmp.ge.s32.totalorder %s55, 8
      %s57 = scalar_select %p56, 0, %s55
      %s58 = sadd.s32 1, %s42
      %s59 = scalar_select %p56, %s58, %s42
      %p60 = scmp.ge.s32.totalorder %s59, 1
      %s61 = scalar_select %p60, 0, %s59
      %s62 = ssub.s32 %s42, %s61
      %p63 = scmp.eq.s32.totalorder %s62, 0
      %s65 = sadd.s32 %s64, 1
      %s66 = scalar_select %p63, %s64, %s65
      %p69 = pneg %p63
      %p70 = scmp.eq.s32.totalorder %s35, 15
      %p71 = por %p69, %p70
      %p72 = scmp.ne.s32.totalorder %s64, %s67
      %p73 = scmp.eq.s32.totalorder %s35, 0
      %p74 = por %p72, %p73
      %p75 = scmp.ne.s32.totalorder %s64, %s67
      %p76 = scmp.eq.s32.totalorder %s40, 15
      %p77 = por %p75, %p76
      %p78 = scmp.ne.s32.totalorder %s67, %s68
      %p79 = scmp.eq.s32.totalorder %s40, 0
      %p80 = por %p78, %p79
      %p81 = scmp.ne.s32.totalorder %s67, %s68
      %p82 = scmp.eq.s32.totalorder %s41, 15
      %p83 = por %p81, %p82
      %p85 = scmp.ne.s32.totalorder %s68, %s84
      %p86 = scmp.eq.s32.totalorder %s41, 0
      %p87 = por %p85, %p86
      %s88 = sld [smem:[#allocation4 + %s43]]
      %s89 = sshra.s32 %s44, 7
      %s90 = sand.u32 %s44, 127
      %s91 = sadd.s32 %s89, %s43
      %s92 = smul.u32 %s91, 128
      %s93 = sshra.s32 %s44, 7
      %s94 = sand.u32 %s44, 127
      %s95 = sadd.s32 %s92, %s94
      %s96 = sld [smem:[#allocation6 + %s95]]
      %s97 = sld [smem:[#allocation4 + %s57]]
      %s98 = sshra.s32 %s53, 7
      %s99 = sand.u32 %s53, 127
      %s100 = sadd.s32 %s98, %s57
      %s101 = smul.u32 %s100, 128
      %s102 = sshra.s32 %s53, 7
      %s103 = sand.u32 %s53, 127
      %s104 = sadd.s32 %s101, %s103
      %s105 = sld [smem:[#allocation6 + %s104]]
      %s106 = ssub.s32 %s88, %s97
      %s107 = ssub.s32 %s96, %s105
      %s108 = sor.u32 %s106, %s107
      %p109 = scmp.eq.s32.totalorder %s108, 0
      %s111 = sadd.s32 %s110, 1
      %s112 = scalar_select %p109, %s110, %s111
      %p115 = pneg %p109
      %p116 = scmp.eq.s32.totalorder %s35, 15
      %p117 = por %p115, %p116
      %p118 = scmp.ne.s32.totalorder %s110, %s113
      %p119 = scmp.eq.s32.totalorder %s35, 0
      %p120 = por %p118, %p119
      %p121 = scmp.ne.s32.totalorder %s110, %s113
      %p122 = scmp.eq.s32.totalorder %s40, 15
      %p123 = por %p121, %p122
      %p124 = scmp.ne.s32.totalorder %s113, %s114
      %p125 = scmp.eq.s32.totalorder %s40, 0
      %p126 = por %p124, %p125
      %p127 = scmp.ne.s32.totalorder %s113, %s114
      %p128 = scmp.eq.s32.totalorder %s41, 15
      %p129 = por %p127, %p128
      %p131 = scmp.ne.s32.totalorder %s114, %s130
      %p132 = scmp.eq.s32.totalorder %s41, 0
      %p133 = por %p131, %p132
      %s134 = sld [smem:[#allocation4 + %s43]]
      %s135 = sshra.s32 %s44, 7
      %s136 = sand.u32 %s44, 127
      %s137 = sadd.s32 %s135, %s43
      %s138 = smul.u32 %s137, 128
      %s139 = sshra.s32 %s44, 7
      %s140 = sand.u32 %s44, 127
      %s141 = sadd.s32 %s138, %s140
      %s142 = sld [smem:[#allocation6 + %s141]]
      %s143 = sld [smem:[#allocation4 + %s57]]
      %s144 = sshra.s32 %s53, 7
      %s145 = sand.u32 %s53, 127
      %s146 = sadd.s32 %s144, %s57
      %s147 = smul.u32 %s146, 128
      %s148 = sshra.s32 %s53, 7
      %s149 = sand.u32 %s53, 127
      %s150 = sadd.s32 %s147, %s149
      %s151 = sld [smem:[#allocation6 + %s150]]
      %s152 = ssub.s32 %s134, %s143
      %s153 = ssub.s32 %s142, %s151
      %s154 = sor.u32 %s152, %s153
      %p155 = scmp.eq.s32.totalorder %s154, 0
      %s157 = sadd.s32 %s156, 1
      %s158 = scalar_select %p155, %s156, %s157
      %p161 = pneg %p155
      %p162 = scmp.eq.s32.totalorder %s35, 15
      %p163 = por %p161, %p162
      %p164 = scmp.ne.s32.totalorder %s156, %s159
      %p165 = scmp.eq.s32.totalorder %s35, 0
      %p166 = por %p164, %p165
      %p167 = scmp.ne.s32.totalorder %s156, %s159
      %p168 = scmp.eq.s32.totalorder %s40, 15
      %p169 = por %p167, %p168
      %p170 = scmp.ne.s32.totalorder %s159, %s160
      %p171 = scmp.eq.s32.totalorder %s40, 0
      %p172 = por %p170, %p171
      %p173 = scmp.ne.s32.totalorder %s159, %s160
      %p174 = scmp.eq.s32.totalorder %s41, 15
      %p175 = por %p173, %p174
      %p177 = scmp.ne.s32.totalorder %s160, %s176
      %p178 = scmp.eq.s32.totalorder %s41, 0
      %p179 = por %p177, %p178
      %s180 = sld [smem:[#allocation4 + %s43]]
      %s181 = sshra.s32 %s44, 7
      %s182 = sand.u32 %s44, 127
      %s183 = sadd.s32 %s181, %s43
      %s184 = smul.u32 %s183, 128
      %s185 = sshra.s32 %s44, 7
      %s186 = sand.u32 %s44, 127
      %s187 = sadd.s32 %s184, %s186
      %s188 = sld [smem:[#allocation6 + %s187]]
      %s189 = sld [smem:[#allocation4 + %s57]]
      %s190 = sshra.s32 %s53, 7
      %s191 = sand.u32 %s53, 127
      %s192 = sadd.s32 %s190, %s57
      %s193 = smul.u32 %s192, 128
      %s194 = sshra.s32 %s53, 7
      %s195 = sand.u32 %s53, 127
      %s196 = sadd.s32 %s193, %s195
      %s197 = sld [smem:[#allocation6 + %s196]]
      %s198 = ssub.s32 %s180, %s189
      %s199 = ssub.s32 %s188, %s197
      %s200 = sor.u32 %s198, %s199
      %p201 = scmp.eq.s32.totalorder %s200, 0
      %s203 = sadd.s32 %s202, 1
      %s204 = scalar_select %p201, %s202, %s203
      %p207 = pneg %p201
      %p208 = scmp.eq.s32.totalorder %s35, 15
      %p209 = por %p207, %p208
      %p210 = scmp.ne.s32.totalorder %s202, %s205
      %p211 = scmp.eq.s32.totalorder %s35, 0
      %p212 = por %p210, %p211
      %p213 = scmp.ne.s32.totalorder %s202, %s205
      %p214 = scmp.eq.s32.totalorder %s40, 15
      %p215 = por %p213, %p214
      %p216 = scmp.ne.s32.totalorder %s205, %s206
      %p217 = scmp.eq.s32.totalorder %s40, 0
      %p218 = por %p216, %p217
      %p219 = scmp.ne.s32.totalorder %s205, %s206
      %p220 = scmp.eq.s32.totalorder %s41, 15
      %p221 = por %p219, %p220
      %p223 = scmp.ne.s32.totalorder %s206, %s222
      %p224 = scmp.eq.s32.totalorder %s41, 0
      %p225 = por %p223, %p224
      %s226 = sld [smem:[#allocation4 + %s43]]
      %s227 = sld [smem:[#allocation4 + %s57]]
      %s228 = ssub.s32 %s226, %s227
      %s229 = ssub.s32 %s42, %s61
      %s230 = sor.u32 %s228, %s229
      %p231 = scmp.eq.s32.totalorder %s230, 0
      %s233 = sadd.s32 %s232, 1
      %s234 = scalar_select %p231, %s232, %s233
      %p237 = pneg %p231
      %p238 = scmp.eq.s32.totalorder %s35, 15
      %p239 = por %p237, %p238
      %p240 = scmp.ne.s32.totalorder %s232, %s235
      %p241 = scmp.eq.s32.totalorder %s35, 0
      %p242 = por %p240, %p241
      %p243 = scmp.ne.s32.totalorder %s232, %s235
      %p244 = scmp.eq.s32.totalorder %s40, 15
      %p245 = por %p243, %p244
      %p246 = scmp.ne.s32.totalorder %s235, %s236
      %p247 = scmp.eq.s32.totalorder %s40, 0
      %p248 = por %p246, %p247
      %p249 = scmp.ne.s32.totalorder %s235, %s236
      %p250 = scmp.eq.s32.totalorder %s41, 15
      %p251 = por %p249, %p250
      %p253 = scmp.ne.s32.totalorder %s236, %s252
      %p254 = scmp.eq.s32.totalorder %s41, 0
      %p255 = por %p253, %p254
      %s256 = ssub.s32 %s42, %s61
      %p257 = scmp.eq.s32.totalorder %s256, 0
      %s259 = sadd.s32 %s258, 1
      %s260 = scalar_select %p257, %s258, %s259
      %p263 = pneg %p257
      %p264 = scmp.eq.s32.totalorder %s35, 15
      %p265 = por %p263, %p264
      %p266 = scmp.ne.s32.totalorder %s258, %s261
      %p267 = scmp.eq.s32.totalorder %s35, 0
      %p268 = por %p266, %p267
      %p269 = scmp.ne.s32.totalorder %s258, %s261
      %p270 = scmp.eq.s32.totalorder %s40, 15
      %p271 = por %p269, %p270
      %p272 = scmp.ne.s32.totalorder %s261, %s262
      %p273 = scmp.eq.s32.totalorder %s40, 0
      %p274 = por %p272, %p273
      %p275 = scmp.ne.s32.totalorder %s261, %s262
      %p276 = scmp.eq.s32.totalorder %s41, 15
      %p277 = por %p275, %p276
      %p279 = scmp.ne.s32.totalorder %s262, %s278
      %p280 = scmp.eq.s32.totalorder %s41, 0
      %p281 = por %p279, %p280
      %p282 = scmp.le.s32.totalorder 1, %s35
      %p283 = scmp.lt.s32.totalorder %s35, 17
      %p284 = pnand %p282, %p283
      %p285 = pneg %p284
      // Predicated region
      $region9: #{tpu_custom_call.1} parent=5 // pred_check
        _
      $region10: #{tpu_custom_call.1} parent=5 // pred_check_branch
        %287 = sbr.rel (%p284) target = $region12
      $region11: #{tpu_custom_call.1} parent=5 // pred_region
        %s288 = ssub.s32 %s35, 1
        // Predicated region
        $region13: #{tpu_custom_call.1} parent=11 // pred_check
          %p289 = pneg %p80
        $region14: #{tpu_custom_call.1} parent=11 // pred_check_branch
          %291 = sbr.rel (%p289) target = $region16
        $region15: #{tpu_custom_call.1} parent=11 // pred_region
          %p292 = scmp.lt.s32.totalorder %s45, 0
          %s293 = scalar_select %p292, %s45, 0
          %s294 = smul.addr %s293, 4
          %s295 = scalar_lea.vmem %s3, %s294
        $region16: #{tpu_custom_call.1} parent=11 // pred_fallthru
          _
      $region12: #{tpu_custom_call.1} parent=5 // pred_fallthru
        _
      %p296 = scmp.lt.s32.totalorder %s35, 16
      // Predicated region
      $region17: #{tpu_custom_call.1} parent=5 // pred_check
        %p297 = pneg %p296
      $region18: #{tpu_custom_call.1} parent=5 // pred_check_branch
        %299 = sbr.rel (%p297) target = $region20
      $region19: #{tpu_custom_call.1} parent=5 // pred_region
        // Predicated region
        $region21: #{tpu_custom_call.1} parent=19 // pred_check
          %p300 = pneg %p120
        $region22: #{tpu_custom_call.1} parent=19 // pred_check_branch
          %302 = sbr.rel (%p300) target = $region24
        $region23: #{tpu_custom_call.1} parent=19 // pred_region
          %s303 = sand.u32 %s110, 1
          %s304 = scalar_lea.sflag [#allocation8], %s303
          %s305 = sand.u32 %s110, 1
          %s306 = smul.addr %s305, 64
          %s307 = scalar_lea.vmem [#allocation7], %s306
          %s308 = sld [smem:[#allocation4 + %s43]]
          %s309 = sshra.s32 %s44, 7
          %s310 = sand.u32 %s44, 127
          %s311 = sadd.s32 %s309, %s43
          %s312 = smul.u32 %s311, 128
          %s313 = sshra.s32 %s44, 7
          %s314 = sand.u32 %s44, 127
          %s315 = sadd.s32 %s312, %s314
          %s316 = sld [smem:[#allocation6 + %s315]]
          %s318 = ssub.s32 1024, 1024
          %319 = vsyncadd %s304, %s318
          %s320 = smul.addr %s308, 32
          %s321 = sadd.s32 %s316, %s320
          %s322 = smul.addr %s321, 64
          %s323 = scalar_lea.hbm %s4, %s322
          %s324 = sshll.u32 %s307, 4
          %s325 = int_to_ptr.vmem [resolvable:$true] %s324
          %330 = dma.hbm_to_vmem [thread:$0]  %s323, 1024, %s325, %s304, 128, 64, 4
        $region24: #{tpu_custom_call.1} parent=19 // pred_fallthru
          _
        // Predicated region
        $region25: #{tpu_custom_call.1} parent=19 // pred_check
          %p331 = pneg %p166
        $region26: #{tpu_custom_call.1} parent=19 // pred_check_branch
          %333 = sbr.rel (%p331) target = $region28
        $region27: #{tpu_custom_call.1} parent=19 // pred_region
          %s334 = sand.u32 %s35, 1
          %s335 = scalar_lea.sflag [#allocation11], %s334
          %s336 = sand.u32 %s156, 1
          %s337 = smul.addr %s336, 64
          %s338 = scalar_lea.vmem [#allocation10], %s337
          %s339 = sld [smem:[#allocation4 + %s43]]
          %s340 = sshra.s32 %s44, 7
          %s341 = sand.u32 %s44, 127
          %s342 = sadd.s32 %s340, %s43
          %s343 = smul.u32 %s342, 128
          %s344 = sshra.s32 %s44, 7
          %s345 = sand.u32 %s44, 127
          %s346 = sadd.s32 %s343, %s345
          %s347 = sld [smem:[#allocation6 + %s346]]
          %s349 = ssub.s32 1024, 1024
          %350 = vsyncadd %s335, %s349
          %s351 = smul.addr %s339, 32
          %s352 = sadd.s32 %s347, %s351
          %s353 = smul.addr %s352, 64
          %s354 = scalar_lea.hbm %s5, %s353
          %s355 = sshll.u32 %s338, 4
          %s356 = int_to_ptr.vmem [resolvable:$true] %s355
          %361 = dma.hbm_to_vmem [thread:$0]  %s354, 1024, %s356, %s335, 128, 64, 4
        $region28: #{tpu_custom_call.1} parent=19 // pred_fallthru
          _
        // Predicated region
        $region29: #{tpu_custom_call.1} parent=19 // pred_check
          %p362 = pneg %p212
        $region30: #{tpu_custom_call.1} parent=19 // pred_check_branch
          %364 = sbr.rel (%p362) target = $region32
        $region31: #{tpu_custom_call.1} parent=19 // pred_region
          %s365 = sand.u32 %s35, 1
          %s366 = scalar_lea.sflag [#allocation11], %s365
          %s367 = sand.u32 %s202, 1
          %s368 = smul.addr %s367, 64
          %s369 = scalar_lea.vmem [#allocation12], %s368
          %s370 = sld [smem:[#allocation4 + %s43]]
          %s371 = sshra.s32 %s44, 7
          %s372 = sand.u32 %s44, 127
          %s373 = sadd.s32 %s371, %s43
          %s374 = smul.u32 %s373, 128
          %s375 = sshra.s32 %s44, 7
          %s376 = sand.u32 %s44, 127
          %s377 = sadd.s32 %s374, %s376
          %s378 = sld [smem:[#allocation6 + %s377]]
          %s379 = smul.u32 16, %s378
          %s381 = ssub.s32 1024, 1024
          %382 = vsyncadd %s366, %s381
          %s383 = smul.addr %s370, 32
          %s384 = sadd.s32 %s379, %s383
          %s385 = smul.addr %s384, 64
          %s386 = scalar_lea.hbm %s6, %s385
          %s387 = sshll.u32 %s369, 4
          %s388 = int_to_ptr.vmem [resolvable:$true] %s387
          %393 = dma.hbm_to_vmem [thread:$0]  %s386, 1024, %s388, %s366, 64, 64, 4
        $region32: #{tpu_custom_call.1} parent=19 // pred_fallthru
          _
        // Predicated region
        $region33: #{tpu_custom_call.1} parent=19 // pred_check
          %p394 = pneg %p242
        $region34: #{tpu_custom_call.1} parent=19 // pred_check_branch
          %396 = sbr.rel (%p394) target = $region36
        $region35: #{tpu_custom_call.1} parent=19 // pred_region
          %s397 = sld [smem:[#allocation4 + %s43]]
          %p398 = scmp.lt.s32.totalorder %s397, 7
          %s399 = scalar_select %p398, %s397, 7
          %p400 = scmp.lt.s32.totalorder %s42, 0
          %s401 = scalar_select %p400, %s42, 0
          %s402 = sadd.s32 %s401, %s399
          %s403 = smul.addr %s402, 8
          %s404 = scalar_lea.vmem %s7, %s403
          %s405 = sld [smem:[#allocation4 + %s43]]
        $region36: #{tpu_custom_call.1} parent=19 // pred_fallthru
          _
      $region20: #{tpu_custom_call.1} parent=5 // pred_fallthru
        _
      %p406 = scmp.le.s32.totalorder 1, %s35
      %p407 = scmp.lt.s32.totalorder %s35, 17
      %p408 = pnand %p406, %p407
      %p409 = pneg %p408
      // Predicated region
      $region37: #{tpu_custom_call.1} parent=5 // pred_check
        _
      $region38: #{tpu_custom_call.1} parent=5 // pred_check_branch
        %411 = sbr.rel (%p408) target = $region40
      $region39: #{tpu_custom_call.1} parent=5 // pred_region
        %s412 = ssub.s32 %s35, 1
        %s413 = sand.u32 %s113, 1
        %s414 = scalar_lea.sflag [#allocation8], %s413
        %s415 = sand.u32 %s113, 1
        %s416 = smul.addr %s415, 64
        %s417 = scalar_lea.vmem [#allocation7], %s416
        // Predicated region
        $region41: #{tpu_custom_call.1} parent=39 // pred_check
          %p418 = pneg %p126
        $region42: #{tpu_custom_call.1} parent=39 // pred_check_branch
          %420 = sbr.rel (%p418) target = $region44
        $region43: #{tpu_custom_call.1} parent=39 // pred_region
          %421 = dma.done %s414, 1024
        $region44: #{tpu_custom_call.1} parent=39 // pred_fallthru
          _
        %s422 = sand.u32 %s40, 1
        %s423 = scalar_lea.sflag [#allocation11], %s422
        %s424 = sand.u32 %s159, 1
        %s425 = smul.addr %s424, 64
        %s426 = scalar_lea.vmem [#allocation10], %s425
        // Predicated region
        $region45: #{tpu_custom_call.1} parent=39 // pred_check
          %p427 = pneg %p172
        $region46: #{tpu_custom_call.1} parent=39 // pred_check_branch
          %429 = sbr.rel (%p427) target = $region48
        $region47: #{tpu_custom_call.1} parent=39 // pred_region
          %430 = dma.done %s423, 1024
        $region48: #{tpu_custom_call.1} parent=39 // pred_fallthru
          _
        %s431 = sand.u32 %s40, 1
        %s432 = scalar_lea.sflag [#allocation11], %s431
        %s433 = sand.u32 %s205, 1
        %s434 = smul.addr %s433, 64
        %s435 = scalar_lea.vmem [#allocation12], %s434
        // Predicated region
        $region49: #{tpu_custom_call.1} parent=39 // pred_check
          %p436 = pneg %p218
        $region50: #{tpu_custom_call.1} parent=39 // pred_check_branch
          %438 = sbr.rel (%p436) target = $region52
        $region51: #{tpu_custom_call.1} parent=39 // pred_region
          %439 = dma.done %s432, 1024
        $region52: #{tpu_custom_call.1} parent=39 // pred_fallthru
          _
        %p440 = scmp.lt.s32.totalorder %s45, 0
        %s441 = scalar_select %p440, %s45, 0
        %s442 = smul.addr %s441, 4
        %s443 = scalar_lea.vmem %s3, %s442
        %p444 = pneg %p80
        %p445 = pneg %p77
        %s446 = sand.u32 %s113, 1
        %s447 = scalar_lea.sflag [#allocation8], %s446
        %s448 = sand.u32 %s113, 1
        %s449 = smul.addr %s448, 64
        %s450 = scalar_lea.vmem [#allocation7], %s449
        %p451 = pneg %p126
        %p452 = pneg %p123
        %s453 = sand.u32 %s40, 1
        %s454 = scalar_lea.sflag [#allocation11], %s453
        %s455 = sand.u32 %s159, 1
        %s456 = smul.addr %s455, 64
        %s457 = scalar_lea.vmem [#allocation10], %s456
        %p458 = pneg %p172
        %p459 = pneg %p169
        %s460 = sand.u32 %s40, 1
        %s461 = scalar_lea.sflag [#allocation11], %s460
        %s462 = sand.u32 %s205, 1
        %s463 = smul.addr %s462, 64
        %s464 = scalar_lea.vmem [#allocation12], %s463
        %p465 = pneg %p218
        %p466 = pneg %p215
        %s467 = sld [smem:[#allocation4 + %s46]]
        %p468 = scmp.lt.s32.totalorder %s467, 7
        %s469 = scalar_select %p468, %s467, 7
        %p470 = scmp.lt.s32.totalorder %s45, 0
        %s471 = scalar_select %p470, %s45, 0
        %s472 = sadd.s32 %s471, %s469
        %s473 = smul.addr %s472, 8
        %s474 = scalar_lea.vmem %s7, %s473
        %p475 = pneg %p248
        %p476 = pneg %p245
        %p477 = pneg %p274
        %p478 = pneg %p271
        %p479 = scmp.lt.s32.totalorder %s45, 0
        %s480 = scalar_select %p479, %s45, 0
        %s481 = smul.addr %s480, 4
        %s482 = scalar_lea.vmem %s3, %s481
        %s483 = sld [smem:[#allocation4 + %s46]]
        %s484 = sshra.s32 %s47, 7
        %s485 = sand.u32 %s47, 127
        %s486 = sadd.s32 %s484, %s46
        %s487 = smul.u32 %s486, 128
        %s488 = sshra.s32 %s47, 7
        %s489 = sand.u32 %s47, 127
        %s490 = sadd.s32 %s487, %s489
        %s491 = sld [smem:[#allocation6 + %s490]]
        %s492 = sld [smem:[#allocation4 + %s46]]
        %s493 = sshra.s32 %s47, 7
        %s494 = sand.u32 %s47, 127
        %s495 = sadd.s32 %s493, %s46
        %s496 = smul.u32 %s495, 128
        %s497 = sshra.s32 %s47, 7
        %s498 = sand.u32 %s47, 127
        %s499 = sadd.s32 %s496, %s498
        %s500 = sld [smem:[#allocation6 + %s499]]
        %s501 = sld [smem:[#allocation4 + %s46]]
        %s502 = sshra.s32 %s47, 7
        %s503 = sand.u32 %s47, 127
        %s504 = sadd.s32 %s502, %s46
        %s505 = smul.u32 %s504, 128
        %s506 = sshra.s32 %s47, 7
        %s507 = sand.u32 %s47, 127
        %s508 = sadd.s32 %s505, %s507
        %s509 = sld [smem:[#allocation6 + %s508]]
        %s510 = smul.u32 16, %s509
        %s511 = sld [smem:[#allocation4 + %s46]]
        %p512 = scmp.lt.s32.totalorder %s511, 7
        %s513 = scalar_select %p512, %s511, 7
        %p514 = scmp.lt.s32.totalorder %s45, 0
        %s515 = scalar_select %p514, %s45, 0
        %s516 = sadd.s32 %s515, %s513
        %s517 = smul.addr %s516, 8
        %s518 = scalar_lea.vmem %s7, %s517
        %s519 = sld [smem:[#allocation4 + %s46]]
        %p521 = scmp.eq.s32.totalorder %s46, 0
        %p522 = scmp.eq.s32.totalorder %s47, 0
        %p523 = pnand %p521, %p522
        %p524 = pneg %p523
        // Predicated region
        $region53: #{tpu_custom_call.1} parent=39 // pred_check
          _
        $region54: #{tpu_custom_call.1} parent=39 // pred_check_branch
          %526 = sbr.rel (%p523) target = $region56
        $region55: #{tpu_custom_call.1} parent=39 // pred_region
          %527 = vst [vmem:[#allocation2] sm:$0xff] 0.0
        $region56: #{tpu_custom_call.1} parent=39 // pred_fallthru
          _
        %s528 = sld [smem:[#allocation5 + %s46]]
        %p529 = scmp.eq.s32.totalorder %s528, 1
        // Predicated region
        $region57: #{tpu_custom_call.1} parent=39 // pred_check
          %p530 = pneg %p529
        $region58: #{tpu_custom_call.1} parent=39 // pred_check_branch
          %532 = sbr.rel (%p530) target = $region60
        $region59: #{tpu_custom_call.1} parent=39 // pred_region
          %v533 = vld [vmem:[%s482] sm:$0xf]
          %v534 = vld [vmem:[%s417] sm:$0xf]
          %v535 = vld [vmem:[%s417 + $0x4] sm:$0xf]
          %v536 = vld [vmem:[%s417 + $0x8] sm:$0xf]
          %v537 = vld [vmem:[%s417 + $0xc] sm:$0xf]
          %v538 = vld [vmem:[%s417 + $0x10] sm:$0xf]
          %v539 = vld [vmem:[%s417 + $0x14] sm:$0xf]
          %v540 = vld [vmem:[%s417 + $0x18] sm:$0xf]
          %v541 = vld [vmem:[%s417 + $0x1c] sm:$0xf]
          %v542 = vld [vmem:[%s417 + $0x20] sm:$0xf]
          %v543 = vld [vmem:[%s417 + $0x24] sm:$0xf]
          %v544 = vld [vmem:[%s417 + $0x28] sm:$0xf]
          %v545 = vld [vmem:[%s417 + $0x2c] sm:$0xf]
          %v546 = vld [vmem:[%s417 + $0x30] sm:$0xf]
          %v547 = vld [vmem:[%s417 + $0x34] sm:$0xf]
          %v548 = vld [vmem:[%s417 + $0x38] sm:$0xf]
          %v549 = vld [vmem:[%s417 + $0x3c] sm:$0xf]
          %v566 = vunpack.c.l.b16 %v534
          %v567 = vunpack.c.l.b16 %v535
          %v568 = vunpack.c.l.b16 %v536
          %v569 = vunpack.c.l.b16 %v537
          %v570 = vunpack.c.l.b16 %v538
          %v571 = vunpack.c.l.b16 %v539
          %v572 = vunpack.c.l.b16 %v540
          %v573 = vunpack.c.l.b16 %v541
          %v574 = vunpack.c.l.b16 %v542
          %v575 = vunpack.c.l.b16 %v543
          %v576 = vunpack.c.l.b16 %v544
          %v577 = vunpack.c.l.b16 %v545
          %v578 = vunpack.c.l.b16 %v546
          %v579 = vunpack.c.l.b16 %v547
          %v580 = vunpack.c.l.b16 %v548
          %v581 = vunpack.c.l.b16 %v549
          %v582 = vpack.c.b16 %v567, %v566
          %v583 = vpack.c.b16 %v569, %v568
          %v584 = vpack.c.b16 %v571, %v570
          %v585 = vpack.c.b16 %v573, %v572
          %v586 = vpack.c.b16 %v575, %v574
          %v587 = vpack.c.b16 %v577, %v576
          %v588 = vpack.c.b16 %v579, %v578
          %v589 = vpack.c.b16 %v581, %v580
          %598 = vmatprep.subr.bf16.mxu0 0
          %599 = vmatpush1.bf16.msra.mxu0 %v589
          %600 = vmatprep.subr.bf16.mxu0 0
          %601 = vmatpush1.bf16.msra.mxu0 %v588
          %602 = vmatprep.subr.bf16.mxu0 0
          %603 = vmatpush1.bf16.msra.mxu0 %v587
          %604 = vmatprep.subr.bf16.mxu0 0
          %605 = vmatpush1.bf16.msra.mxu0 %v586
          %606 = vmatprep.subr.bf16.mxu0 0
          %607 = vmatpush1.bf16.msra.mxu0 %v585
          %608 = vmatprep.subr.bf16.mxu0 0
          %609 = vmatpush1.bf16.msra.mxu0 %v584
          %610 = vmatprep.subr.bf16.mxu0 0
          %611 = vmatpush1.bf16.msra.mxu0 %v583
          %612 = vmatprep.subr.bf16.mxu0 0
          %613 = vmatpush1.bf16.msra.mxu0 %v582
          %614 = vmatprep.subr.bf16.mxu0 0
          %615 = vmatpush2.bf16.msra.mxu0 0
          %616 = vmatprep.subr.bf16.mxu0 0
          %617 = vmatpush2.bf16.msra.mxu0 0
          %618 = vmatprep.subr.bf16.mxu0 0
          %619 = vmatpush2.bf16.msra.mxu0 0
          %620 = vmatprep.subr.bf16.mxu0 0
          %621 = vmatpush2.bf16.msra.mxu0 0
          %622 = vmatprep.subr.bf16.mxu0 0
          %623 = vmatpush2.bf16.msra.mxu0 0
          %624 = vmatprep.subr.bf16.mxu0 0
          %625 = vmatpush2.bf16.msra.mxu0 0
          %626 = vmatprep.subr.bf16.mxu0 0
          %627 = vmatpush2.bf16.msra.mxu0 0
          %628 = vmatprep.subr.bf16.mxu0 0
          %629 = vmatpush2.bf16.msra.mxu0 0
          %630 = vmatprep.mubr.bf16.mxu0 0
          %631 = vmatmul.mubr.bf16.gmra.mxu0 %v533
          %v632 = vpop.f32.mrf.mxu0
          %v633 = vadd.f32 0.0, %v632
          %v634 = vpop.f32.mrf.mxu0
          %v635 = vpop.f32.mrf.mxu0
          %v636 = vpop.f32.mrf.mxu0
          %637 = vdwg.mxu0
          %v638 = vld [vmem:[%s426] sm:$0xf]
          %v639 = vld [vmem:[%s426 + $0x4] sm:$0xf]
          %v640 = vld [vmem:[%s426 + $0x8] sm:$0xf]
          %v641 = vld [vmem:[%s426 + $0xc] sm:$0xf]
          %v642 = vld [vmem:[%s426 + $0x10] sm:$0xf]
          %v643 = vld [vmem:[%s426 + $0x14] sm:$0xf]
          %v644 = vld [vmem:[%s426 + $0x18] sm:$0xf]
          %v645 = vld [vmem:[%s426 + $0x1c] sm:$0xf]
          %v646 = vld [vmem:[%s426 + $0x20] sm:$0xf]
          %v647 = vld [vmem:[%s426 + $0x24] sm:$0xf]
          %v648 = vld [vmem:[%s426 + $0x28] sm:$0xf]
          %v649 = vld [vmem:[%s426 + $0x2c] sm:$0xf]
          %v650 = vld [vmem:[%s426 + $0x30] sm:$0xf]
          %v651 = vld [vmem:[%s426 + $0x34] sm:$0xf]
          %v652 = vld [vmem:[%s426 + $0x38] sm:$0xf]
          %v653 = vld [vmem:[%s426 + $0x3c] sm:$0xf]
          %v670 = vunpack.c.l.b16 %v638
          %v671 = vunpack.c.l.b16 %v639
          %v672 = vunpack.c.l.b16 %v640
          %v673 = vunpack.c.l.b16 %v641
          %v674 = vunpack.c.l.b16 %v642
          %v675 = vunpack.c.l.b16 %v643
          %v676 = vunpack.c.l.b16 %v644
          %v677 = vunpack.c.l.b16 %v645
          %v678 = vunpack.c.l.b16 %v646
          %v679 = vunpack.c.l.b16 %v647
          %v680 = vunpack.c.l.b16 %v648
          %v681 = vunpack.c.l.b16 %v649
          %v682 = vunpack.c.l.b16 %v650
          %v683 = vunpack.c.l.b16 %v651
          %v684 = vunpack.c.l.b16 %v652
          %v685 = vunpack.c.l.b16 %v653
          %v686 = vpack.c.b16 %v671, %v670
          %v687 = vpack.c.b16 %v673, %v672
          %v688 = vpack.c.b16 %v675, %v674
          %v689 = vpack.c.b16 %v677, %v676
          %v690 = vpack.c.b16 %v679, %v678
          %v691 = vpack.c.b16 %v681, %v680
          %v692 = vpack.c.b16 %v683, %v682
          %v693 = vpack.c.b16 %v685, %v684
          %702 = vmatprep.subr.bf16.mxu0 0
          %703 = vmatpush1.bf16.msra.mxu0 %v693
          %704 = vmatprep.subr.bf16.mxu0 0
          %705 = vmatpush1.bf16.msra.mxu0 %v692
          %706 = vmatprep.subr.bf16.mxu0 0
          %707 = vmatpush1.bf16.msra.mxu0 %v691
          %708 = vmatprep.subr.bf16.mxu0 0
          %709 = vmatpush1.bf16.msra.mxu0 %v690
          %710 = vmatprep.subr.bf16.mxu0 0
          %711 = vmatpush1.bf16.msra.mxu0 %v689
          %712 = vmatprep.subr.bf16.mxu0 0
          %713 = vmatpush1.bf16.msra.mxu0 %v688
          %714 = vmatprep.subr.bf16.mxu0 0
          %715 = vmatpush1.bf16.msra.mxu0 %v687
          %716 = vmatprep.subr.bf16.mxu0 0
          %717 = vmatpush1.bf16.msra.mxu0 %v686
          %718 = vmatprep.subr.bf16.mxu0 0
          %719 = vmatpush2.bf16.msra.mxu0 0
          %720 = vmatprep.subr.bf16.mxu0 0
          %721 = vmatpush2.bf16.msra.mxu0 0
          %722 = vmatprep.subr.bf16.mxu0 0
          %723 = vmatpush2.bf16.msra.mxu0 0
          %724 = vmatprep.subr.bf16.mxu0 0
          %725 = vmatpush2.bf16.msra.mxu0 0
          %726 = vmatprep.subr.bf16.mxu0 0
          %727 = vmatpush2.bf16.msra.mxu0 0
          %728 = vmatprep.subr.bf16.mxu0 0
          %729 = vmatpush2.bf16.msra.mxu0 0
          %730 = vmatprep.subr.bf16.mxu0 0
          %731 = vmatpush2.bf16.msra.mxu0 0
          %732 = vmatprep.subr.bf16.mxu0 0
          %733 = vmatpush2.bf16.msra.mxu0 0
          %734 = vmatprep.mubr.bf16.mxu0 0
          %735 = vmatmul.mubr.bf16.gmra.mxu0 %v533
          %v736 = vpop.f32.mrf.mxu0
          %v737 = vadd.f32 0.0, %v736
          %v738 = vpop.f32.mrf.mxu0
          %v739 = vpop.f32.mrf.mxu0
          %v740 = vpop.f32.mrf.mxu0
          %741 = vdwg.mxu0
          %v742 = vxor.u32 %v633, 2147483648
          %v743 = vmul.f32 %v742, 1.442695
          %v744 = vpow.pop %v743
          %v745 = vadd.f32 %v744, 1.0
          %v746 = vrcp.pop %v745
          %v747 = vmul.f32 1.0, %v746
          %v748 = vmul.f32 %v633, %v747
          %v749 = vmul.f32 %v748, %v737
          %v750 = vpack.c.bf16 %v749, %v749
          %v751 = vld [vmem:[%s435] sm:$0xf]
          %v752 = vld [vmem:[%s435 + $0x4] sm:$0xf]
          %v753 = vld [vmem:[%s435 + $0x8] sm:$0xf]
          %v754 = vld [vmem:[%s435 + $0xc] sm:$0xf]
          %v755 = vld [vmem:[%s435 + $0x10] sm:$0xf]
          %v756 = vld [vmem:[%s435 + $0x14] sm:$0xf]
          %v757 = vld [vmem:[%s435 + $0x18] sm:$0xf]
          %v758 = vld [vmem:[%s435 + $0x1c] sm:$0xf]
          %v759 = vld [vmem:[%s435 + $0x20] sm:$0xf]
          %v760 = vld [vmem:[%s435 + $0x24] sm:$0xf]
          %v761 = vld [vmem:[%s435 + $0x28] sm:$0xf]
          %v762 = vld [vmem:[%s435 + $0x2c] sm:$0xf]
          %v763 = vld [vmem:[%s435 + $0x30] sm:$0xf]
          %v764 = vld [vmem:[%s435 + $0x34] sm:$0xf]
          %v765 = vld [vmem:[%s435 + $0x38] sm:$0xf]
          %v766 = vld [vmem:[%s435 + $0x3c] sm:$0xf]
          %v783 = vunpack.c.l.b16 %v751
          %v784 = vunpack.c.l.b16 %v752
          %v785 = vunpack.c.l.b16 %v753
          %v786 = vunpack.c.l.b16 %v754
          %v787 = vunpack.c.l.b16 %v755
          %v788 = vunpack.c.l.b16 %v756
          %v789 = vunpack.c.l.b16 %v757
          %v790 = vunpack.c.l.b16 %v758
          %v791 = vunpack.c.l.b16 %v759
          %v792 = vunpack.c.l.b16 %v760
          %v793 = vunpack.c.l.b16 %v761
          %v794 = vunpack.c.l.b16 %v762
          %v795 = vunpack.c.l.b16 %v763
          %v796 = vunpack.c.l.b16 %v764
          %v797 = vunpack.c.l.b16 %v765
          %v798 = vunpack.c.l.b16 %v766
          %v799 = vpack.c.b16 %v784, %v783
          %v800 = vpack.c.b16 %v786, %v785
          %v801 = vpack.c.b16 %v788, %v787
          %v802 = vpack.c.b16 %v790, %v789
          %v803 = vpack.c.b16 %v792, %v791
          %v804 = vpack.c.b16 %v794, %v793
          %v805 = vpack.c.b16 %v796, %v795
          %v806 = vpack.c.b16 %v798, %v797
          %815 = vmatprep.subr.bf16.mxu0 0
          %816 = vmatpush1.bf16.msra.mxu0 %v806
          %817 = vmatprep.subr.bf16.mxu0 0
          %818 = vmatpush1.bf16.msra.mxu0 %v805
          %819 = vmatprep.subr.bf16.mxu0 0
          %820 = vmatpush1.bf16.msra.mxu0 %v804
          %821 = vmatprep.subr.bf16.mxu0 0
          %822 = vmatpush1.bf16.msra.mxu0 %v803
          %823 = vmatprep.subr.bf16.mxu0 0
          %824 = vmatpush1.bf16.msra.mxu0 %v802
          %825 = vmatprep.subr.bf16.mxu0 0
          %826 = vmatpush1.bf16.msra.mxu0 %v801
          %827 = vmatprep.subr.bf16.mxu0 0
          %828 = vmatpush1.bf16.msra.mxu0 %v800
          %829 = vmatprep.subr.bf16.mxu0 0
          %830 = vmatpush1.bf16.msra.mxu0 %v799
          %831 = vmatprep.subr.bf16.mxu0 0
          %832 = vmatpush2.bf16.msra.mxu0 0
          %833 = vmatprep.subr.bf16.mxu0 0
          %834 = vmatpush2.bf16.msra.mxu0 0
          %835 = vmatprep.subr.bf16.mxu0 0
          %836 = vmatpush2.bf16.msra.mxu0 0
          %837 = vmatprep.subr.bf16.mxu0 0
          %838 = vmatpush2.bf16.msra.mxu0 0
          %839 = vmatprep.subr.bf16.mxu0 0
          %840 = vmatpush2.bf16.msra.mxu0 0
          %841 = vmatprep.subr.bf16.mxu0 0
          %842 = vmatpush2.bf16.msra.mxu0 0
          %843 = vmatprep.subr.bf16.mxu0 0
          %844 = vmatpush2.bf16.msra.mxu0 0
          %845 = vmatprep.subr.bf16.mxu0 0
          %846 = vmatpush2.bf16.msra.mxu0 0
          %847 = vmatprep.mubr.bf16.mxu0 0
          %848 = vmatmul.mubr.bf16.gmra.mxu0 %v750
          %v849 = vpop.f32.mrf.mxu0
          %v850 = vadd.f32 0.0, %v849
          %v851 = vpop.f32.mrf.mxu0
          %v852 = vpop.f32.mrf.mxu0
          %v853 = vpop.f32.mrf.mxu0
          %854 = vdwg.mxu0
          %v855 = vld [vmem:[#allocation2] sm:$0xff]
          %v856 = vld [vmem:[%s518] sm:$0xff]
          %858 = vset.pattern.permute.xlu0 0
          %859 = vperm.xlu0 %858, %v856
          %v860 = vpop.permute.xlu0 %859
          %v862 = vmul.f32 %v850, %v860
          %v863 = vadd.f32 %v855, %v862
          %864 = vst [vmem:[#allocation2] sm:$0xff] %v863
        $region60: #{tpu_custom_call.1} parent=39 // pred_fallthru
          _
        %p865 = scmp.eq.s32.totalorder %s46, 7
        %p866 = scmp.eq.s32.totalorder %s47, 1
        %p867 = pnand %p865, %p866
        %p868 = pneg %p867
        // Predicated region
        $region61: #{tpu_custom_call.1} parent=39 // pred_check
          _
        $region62: #{tpu_custom_call.1} parent=39 // pred_check_branch
          %870 = sbr.rel (%p867) target = $region64
        $region63: #{tpu_custom_call.1} parent=39 // pred_region
          %v871 = vld [vmem:[#allocation2] sm:$0xff]
          %v872 = vpack.c.bf16 %v871, %v871
          %873 = vst [vmem:[#allocation13] sm:$0xf] %v872
        $region64: #{tpu_custom_call.1} parent=39 // pred_fallthru
          _
        // Predicated region
        $region65: #{tpu_custom_call.1} parent=39 // pred_check
          %p874 = pneg %p271
        $region66: #{tpu_custom_call.1} parent=39 // pred_check_branch
          %876 = sbr.rel (%p874) target = $region68
        $region67: #{tpu_custom_call.1} parent=39 // pred_region
          %s878 = ssub.s32 64, 64
          %879 = vsyncadd [#allocation9], %s878
          %s880 = smul.addr %s45, 64
          %s881 = scalar_lea.hbm %s8, %s880
          %s883 = sshll.u32 [#allocation13], 4
          %s884 = int_to_ptr.vmem [resolvable:$true] %s883
          %886 = dma.vmem_to_hbm [thread:$0]  %s884, 64, %s881, [#allocation9]
        $region68: #{tpu_custom_call.1} parent=39 // pred_fallthru
          _
        // Predicated region
        $region69: #{tpu_custom_call.1} parent=39 // pred_check
          %p887 = pneg %p271
        $region70: #{tpu_custom_call.1} parent=39 // pred_check_branch
          %889 = sbr.rel (%p887) target = $region72
        $region71: #{tpu_custom_call.1} parent=39 // pred_region
          %890 = dma.done [#allocation9], 64
        $region72: #{tpu_custom_call.1} parent=39 // pred_fallthru
          _
      $region40: #{tpu_custom_call.1} parent=5 // pred_fallthru
        _
      %p891 = scmp.le.s32.totalorder 2, %s35
      // Predicated region
      $region73: #{tpu_custom_call.1} parent=5 // pred_check
        %p892 = pneg %p891
      $region74: #{tpu_custom_call.1} parent=5 // pred_check_branch
        %894 = sbr.rel (%p892) target = $region76
      $region75: #{tpu_custom_call.1} parent=5 // pred_region
        %s895 = ssub.s32 %s35, 2
      $region76: #{tpu_custom_call.1} parent=5 // pred_fallthru
        _
    $region6: #{tpu_custom_call.1} parent=1 // loop_footer
      %s39 = sadd.s32 1, %s35
    $region7: #{tpu_custom_call.1} parent=1 // loop_footer_branch
      %34 = sbr.rel target = $region3
    $region8: #{tpu_custom_call.1} parent=1 // loop_exit
      _
    %896 = vsyncpa [#allocation8], 1
    %s897 = scalar_lea.sflag [#allocation8], 1
    %898 = vsyncpa %s897, 1
    %899 = vsyncpa [#allocation11], 1
    %s900 = scalar_lea.sflag [#allocation11], 1
    %901 = vsyncpa %s900, 1
    %902 = vsyncpa [#allocation9], 1
    %s903 = scalar_lea.sflag [#allocation9], 1
    %904 = vsyncpa %s903, 1

</llo_original>
